<compile_context>
chip_gen: v7x
topology: tpu7x:2x2x1
jax: 0.10.0
libtpu: 0.0.40
codegen_flags: <defaults>
</compile_context>

<pallas_src>
import math

import jax
import jax.numpy as jnp
from jax.experimental import pallas as pl
from jax.experimental.pallas import tpu as pltpu


def _round_up(x: int, m: int) -> int:
    return ((x + m - 1) // m) * m


def _fourier_kernel(x_ref, e_ref, phase_ref, o_ref):
    # x_ref:     (tm, r*D)      folded row tile of coords
    # e_ref:     (r*D, r*OUT)   block-diagonal expansion (lane broadcast * 2^k)
    # phase_ref: (1, r*OUT)     0.0 for sin slots, pi/2 for cos slots
    # o_ref:     (tm, r*OUT)    lane-dense output tile
    angles = jnp.dot(x_ref[...], e_ref[...], preferred_element_type=jnp.float32)
    o_ref[...] = jnp.sin(angles + phase_ref[...]).astype(o_ref.dtype)


def _make_expansion(in_features: int, num_frequencies: int, r: int):
    """Block-diagonal expansion matrix (r*D, r*OUT) and phase row (1, r*OUT)."""
    D, F = in_features, num_frequencies
    OUT = 2 * D * F
    cols = jnp.arange(OUT)
    k = cols % (2 * F)                                     # slot within a feature
    feat = cols // (2 * F)                                 # which input feature
    scale = 2.0 ** (k % F).astype(jnp.float32)             # frequency multiplier
    # E0[d, d*2F + k] = 2^(k mod F), zero elsewhere.
    E0 = jnp.where(feat[None, :] == jnp.arange(D)[:, None], scale[None, :], 0.0)
    E = jnp.kron(jnp.eye(r, dtype=jnp.float32), E0.astype(jnp.float32))
    phase0 = jnp.where(k < F, 0.0, jnp.pi / 2.0).astype(jnp.float32)
    phase = jnp.tile(phase0, r)[None, :]                   # (1, r*OUT)
    return E, phase


def fourier_feat(coords, num_frequencies: int = 4, *,
                 lane_target: int = 128,            # lanes of output per store
                 out_tile_target_bytes: int = 4 << 20,
                 vmem_cap_bytes: int = 48 << 20):
    """coords: (..., D) float array -> (..., 2*D*num_frequencies)."""
    coords = jnp.asarray(coords)
    D = coords.shape[-1]
    F = num_frequencies
    OUT = 2 * D * F
    lead = coords.shape[:-1]

    x = coords.reshape(-1, D)
    # Keep bf16 inputs in bf16 (halves input-read bytes); anything else -> f32.
    if x.dtype not in (jnp.dtype(jnp.float32), jnp.dtype(jnp.bfloat16)):
        x = x.astype(jnp.float32)
    out_dtype = x.dtype
    itemsize = jnp.dtype(out_dtype).itemsize
    N = x.shape[0]

    # Fold r consecutive rows into the lane axis so output stores are lane-dense.
    if OUT >= lane_target:
        r = 1
    else:
        r = -(-lane_target // OUT)
        if (r * OUT) % 128 != 0:
            r_aligned = math.lcm(OUT, 128) // OUT
            if r_aligned <= 2 * r:
                r = r_aligned
    rD, rOUT = r * D, r * OUT

    # Pad only to a multiple of r (no-op when N % r == 0); the final partial
    # grid block is masked by Pallas rather than padded.
    N_r = _round_up(N, r)
    if N_r != N:
        x = jnp.pad(x, ((0, N_r - N), (0, 0)))
    M = N_r // r
    x_f = x.reshape(M, rD)

    # Row tile: ~out_tile_target_bytes of output per grid step, rounded to the
    # dtype's native sublane multiple, capped so the grid keeps >= 2 steps
    # (v7x has 2 TCs sharing HBM; a single huge tile would serialize onto one).
    sub = 16 if out_dtype == jnp.dtype(jnp.bfloat16) else 8
    tm = max(sub, (out_tile_target_bytes // (rOUT * itemsize)) // sub * sub)
    tm = min(tm, max(sub, _round_up(-(-M // 2), sub)))
    if tm >= M:
        tm = M                 # block dim == full array dim is always legal
    grid_m = -(-M // tm)

    E, phase = _make_expansion(D, F, r)

    in_tile_bytes = tm * rD * itemsize
    out_tile_bytes = tm * rOUT * itemsize
    const_bytes = (rD * rOUT + rOUT) * 4
    vmem_limit = int(min(
        vmem_cap_bytes,
        2 * (in_tile_bytes + out_tile_bytes) + 2 * const_bytes + (4 << 20)))

    cost = pl.CostEstimate(
        flops=2 * M * rD * rOUT,
        transcendentals=M * rOUT,
        bytes_accessed=M * (rD + rOUT) * itemsize + const_bytes,
    )

    out = pl.pallas_call(
        _fourier_kernel,
        out_shape=jax.ShapeDtypeStruct((M, rOUT), out_dtype),
        grid_spec=pltpu.PrefetchScalarGridSpec(
            num_scalar_prefetch=0,
            grid=(grid_m,),
            in_specs=[
                pl.BlockSpec((tm, rD), lambda i: (i, 0)),
                pl.BlockSpec((rD, rOUT), lambda i: (0, 0)),
                pl.BlockSpec((1, rOUT), lambda i: (0, 0)),
            ],
            out_specs=pl.BlockSpec((tm, rOUT), lambda i: (i, 0)),
        ),
        compiler_params=pltpu.CompilerParams(
            dimension_semantics=("parallel",),
            vmem_limit_bytes=vmem_limit),
        cost_estimate=cost,
    )(x_f, E, phase)

    out = out.reshape(N_r, OUT)
    if N_r != N:
        out = out[:N]
    return out.reshape(*lead, OUT)


def _reference(coords, num_frequencies: int = 4):
    c = coords.astype(jnp.float32)
    mul = 2.0 ** jnp.arange(num_frequencies, dtype=jnp.float32)
    pe = c[..., None] * mul                                    # (..., D, F)
    pe = jnp.concatenate([jnp.sin(pe), jnp.cos(pe)], axis=-1)  # (..., D, 2F)
    return pe.reshape(*coords.shape[:-1], -1)                  # (..., 2*D*F)


if __name__ == "__main__":
    key = jax.random.PRNGKey(0)
    k1, k2, k3 = jax.random.split(key, 3)

    # Small shape consistent with the module: batch=2, seq=8, in_features=4.
    B, S, D, F = 2, 8, 4, 4
    coords = jax.random.normal(k1, (B, S, D), dtype=jnp.float32)
    out = jax.block_until_ready(fourier_feat(coords, num_frequencies=F))
    ref = _reference(coords, num_frequencies=F)
    assert out.shape == (B, S, 2 * D * F), out.shape
    assert jnp.allclose(out, ref, atol=1e-4, rtol=1e-4), float(
        jnp.max(jnp.abs(out - ref)))

    # Rows not a multiple of r or tm: exercises the small r-pad and the
    # Pallas-masked partial final grid block (no whole-array pad/slice pass).
    coords2 = jax.random.normal(k2, (1, 1003, D), dtype=jnp.float32)
    out2 = jax.block_until_ready(fourier_feat(coords2, num_frequencies=F))
    ref2 = _reference(coords2, num_frequencies=F)
    assert out2.shape == (1, 1003, 2 * D * F), out2.shape
    assert jnp.allclose(out2, ref2, atol=1e-4, rtol=1e-4), float(
        jnp.max(jnp.abs(out2 - ref2)))

    # bf16 path: no wrapper-side upcast, bf16 stores.
    coords3 = jax.random.normal(k3, (2, 257, D),
                                dtype=jnp.float32).astype(jnp.bfloat16)
    out3 = jax.block_until_ready(fourier_feat(coords3, num_frequencies=F))
    ref3 = _reference(coords3, num_frequencies=F)
    assert out3.shape == (2, 257, 2 * D * F), out3.shape
    assert out3.dtype == jnp.bfloat16
    assert jnp.allclose(out3.astype(jnp.float32), ref3, atol=2e-2, rtol=2e-2)

    print("KERNEL_OK")
</pallas_src>

<mosaic_0001>
module attributes {stable_mosaic.version = 11 : i64} {
  func.func @_fourier_kernel(%arg0: i32, %arg1: memref<4x16xf32, #tpu.memory_space<vmem>>, %arg2: memref<16x128xf32, #tpu.memory_space<vmem>>, %arg3: memref<1x128xf32, #tpu.memory_space<vmem>>, %arg4: memref<4x128xf32, #tpu.memory_space<vmem>>) attributes {dimension_semantics = [#tpu.dimension_semantics<parallel>], iteration_bounds = array<i64: 1>, scalar_prefetch = 0 : i64, scratch_operands = 0 : i64, tpu.core_type = #tpu.core_type<tc>, window_params = [{transform_indices = @transform_0, window_bounds = array<i64: 4, 16>}, {pipeline_mode = #tpu.pipeline_mode<synchronous>, transform_indices = @transform_1, window_bounds = array<i64: 16, 128>}, {pipeline_mode = #tpu.pipeline_mode<synchronous>, transform_indices = @transform_2, window_bounds = array<i64: 1, 128>}, {transform_indices = @transform_3, window_bounds = array<i64: 4, 128>}]} {
    %c0 = arith.constant 0 : index
    %c0_0 = arith.constant 0 : index
    %0 = vector.load %arg1[%c0, %c0_0] : memref<4x16xf32, #tpu.memory_space<vmem>>, vector<4x16xf32>
    %c0_1 = arith.constant 0 : index
    %c0_2 = arith.constant 0 : index
    %1 = vector.load %arg2[%c0_1, %c0_2] : memref<16x128xf32, #tpu.memory_space<vmem>>, vector<16x128xf32>
    %cst = arith.constant dense<0.000000e+00> : vector<4x128xf32>
    %2 = tpu.matmul %0, %1, %cst {dimension_numbers = #tpu.dot_dimension_numbers<[1], [0], [0], [1], [0, 0, 1, 1], [], []>} : vector<4x16xf32>, vector<16x128xf32>, vector<4x128xf32> -> vector<4x128xf32>
    %c0_3 = arith.constant 0 : index
    %c0_4 = arith.constant 0 : index
    %3 = vector.load %arg3[%c0_3, %c0_4] : memref<1x128xf32, #tpu.memory_space<vmem>>, vector<1x128xf32>
    %4 = vector.broadcast %3 : vector<1x128xf32> to vector<4x128xf32>
    %5 = arith.addf %2, %4 : vector<4x128xf32>
    %6 = math.sin %5 : vector<4x128xf32>
    %c0_5 = arith.constant 0 : index
    %c0_6 = arith.constant 0 : index
    %7 = vector.load %arg4[%c0_5, %c0_6] : memref<4x128xf32, #tpu.memory_space<vmem>>, vector<4x128xf32>
    tpu.vector_store %arg4[%c0_5, %c0_6], %6 {strides = array<i32>} : memref<4x128xf32, #tpu.memory_space<vmem>>, vector<4x128xf32>,
    return
  }
  func.func @transform_0(%arg0: i32) -> (i32, i32) {
    %c0_i32 = arith.constant 0 : i32
    %c0_i32_0 = arith.constant 0 : i32
    return %arg0, %c0_i32 : i32, i32
  }
  func.func @transform_1(%arg0: i32) -> (i32, i32) {
    %c0_i32 = arith.constant 0 : i32
    %c0_i32_0 = arith.constant 0 : i32
    %c0_i32_1 = arith.constant 0 : i32
    return %c0_i32, %c0_i32_0 : i32, i32
  }
  func.func @transform_2(%arg0: i32) -> (i32, i32) {
    %c0_i32 = arith.constant 0 : i32
    %c0_i32_0 = arith.constant 0 : i32
    %c0_i32_1 = arith.constant 0 : i32
    return %c0_i32, %c0_i32_0 : i32, i32
  }
  func.func @transform_3(%arg0: i32) -> (i32, i32) {
    %c0_i32 = arith.constant 0 : i32
    %c0_i32_0 = arith.constant 0 : i32
    return %arg0, %c0_i32 : i32, i32
  }
}

</mosaic_0001>

<llo_original>
// kernel: tpu_custom_call.1
$region0: #{tpu_custom_call.1}
  #allocation0 [shape = 'u32[]', space=smem, size = 0x4, offset = 0x4, fixed_abs, tag = 'smem constant byte address 0x4 - core index']
  #allocation1 [shape = 'u32[144,128]{1,0:T(1,128)}', space=vmem, size = 0x12000, scoped, tag = 'internal scratch']
  %s0 = inlined_call_operand.hbm [shape: f32[4,16], index: 0, kind: input, shape index: {}]
  %s1 = inlined_call_operand.hbm [shape: f32[16,128], index: 1, kind: input, shape index: {}]
  %s2 = inlined_call_operand.vmem [shape: f32[1,128], index: 2, kind: input, shape index: {}]
  %s3 = inlined_call_operand.hbm [shape: f32[4,128], index: 3, kind: output, shape index: {}]
  %s4 = sld [smem:[#allocation0]]
  $region30: #{tpu_custom_call.1} parent=0
    _
  %s6 = ssub.s32 1, %s4
  %s7 = scalar_select 0, %s6, %s4
  $region1: #{tpu_custom_call.1} parent=0
    #allocation2 [shape = 'u8[2048]{0}', space=vmem, size = 0x800, scoped, tag = 'input window, operand 0, single buffered']
    #allocation3 [shape = 's32[1]{0}', space=sflag, size = 0x4, scoped, tag = 'scoped memory for tpu_custom_call.1']
    #allocation4 [shape = 's32[1]{0}', space=sflag, size = 0x4, scoped, tag = 'scoped memory for tpu_custom_call.1']
    #allocation5 [shape = 'u8[8192]{0}', space=vmem, size = 0x2000, scoped, tag = 'input window, operand 1, single buffered']
    #allocation6 [shape = 's32[1]{0}', space=sflag, size = 0x4, scoped, tag = 'scoped memory for tpu_custom_call.1']
    #allocation7 [shape = 'u8[2048]{0}', space=vmem, size = 0x800, scoped, tag = 'output window, operand 0, single buffered']
    %8 = vsyncpa [#allocation3], 0
    %9 = vsyncpa [#allocation6], 0
    %10 = vsyncpa [#allocation4], 0
    // Predicated region
    $region2: #{tpu_custom_call.1} parent=1 // pred_check
      _
    $region3: #{tpu_custom_call.1} parent=1 // pred_check_branch
      %12 = sbr.rel (0) target = $region5
    $region4: #{tpu_custom_call.1} parent=1 // pred_region
      %s14 = ssub.s32 64, 64
      %15 = vsyncadd [#allocation3], %s14
      %s17 = sshll.u32 [#allocation2], 4
      %s18 = int_to_ptr.vmem [resolvable:$true] %s17
      %20 = dma.hbm_to_vmem [thread:$0]  %s0, 64, %s18, [#allocation3]
    $region5: #{tpu_custom_call.1} parent=1 // pred_fallthru
      _
    // Predicated region
    $region6: #{tpu_custom_call.1} parent=1 // pred_check
      _
    $region7: #{tpu_custom_call.1} parent=1 // pred_check_branch
      %22 = sbr.rel (0) target = $region9
    $region8: #{tpu_custom_call.1} parent=1 // pred_region
      %s24 = ssub.s32 256, 256
      %25 = vsyncadd [#allocation6], %s24
      %s26 = sshll.u32 [#allocation5], 4
      %s27 = int_to_ptr.vmem [resolvable:$true] %s26
      %32 = dma.hbm_to_vmem [thread:$0]  %s1, 256, %s27, [#allocation6], 128, 128, 8
    $region9: #{tpu_custom_call.1} parent=1 // pred_fallthru
      _
    // Predicated region
    $region10: #{tpu_custom_call.1} parent=1 // pred_check
      _
    $region11: #{tpu_custom_call.1} parent=1 // pred_check_branch
      %34 = sbr.rel (0) target = $region13
    $region12: #{tpu_custom_call.1} parent=1 // pred_region
      _
    $region13: #{tpu_custom_call.1} parent=1 // pred_fallthru
      _
    // Predicated region
    $region14: #{tpu_custom_call.1} parent=1 // pred_check
      _
    $region15: #{tpu_custom_call.1} parent=1 // pred_check_branch
      %36 = sbr.rel (0) target = $region17
    $region16: #{tpu_custom_call.1} parent=1 // pred_region
      %37 = dma.done [#allocation3], 64
    $region17: #{tpu_custom_call.1} parent=1 // pred_fallthru
      _
    // Predicated region
    $region18: #{tpu_custom_call.1} parent=1 // pred_check
      _
    $region19: #{tpu_custom_call.1} parent=1 // pred_check_branch
      %39 = sbr.rel (0) target = $region21
    $region20: #{tpu_custom_call.1} parent=1 // pred_region
      %40 = dma.done [#allocation6], 256
    $region21: #{tpu_custom_call.1} parent=1 // pred_fallthru
      _
    %v41 = vld [vmem:[#allocation2] sm:$0xf]
    %v42 = vld [vmem:[#allocation5] sm:$0xff]
    %v43 = vld [vmem:[#allocation5 + $0x8] sm:$0xff]
    %v44 = vld [vmem:[%s2] sm:$0x1]
    %v46 = vlaneseq
    %v47 = vshrl.u32 %v46, 7
    %v48 = vsub.s32 0, %v47
    %v49 = vrot.slane %v44, %v48
    %vm51 = vcmask 130048
    %v53 = vsel %vm51, %v41, 0
    %55 = vmatprep.subr.mxu0 0.0
    %56 = vmatpush1.msra.mxu0 %v42
    %57 = vmatprep.subr.mxu0 0.0
    %58 = vmatpush1.msra.mxu0 %v43
    %59 = vmatprep.subr.mxu0 0.0
    %60 = vmatpush1.msra.mxu0 0.0
    %61 = vmatprep.subr.mxu0 0.0
    %62 = vmatpush1.msra.mxu0 0.0
    %63 = vmatprep.subr.mxu0 0.0
    %64 = vmatpush1.msra.mxu0 0.0
    %65 = vmatprep.subr.mxu0 0.0
    %66 = vmatpush1.msra.mxu0 0.0
    %67 = vmatprep.subr.mxu0 0.0
    %68 = vmatpush1.msra.mxu0 0.0
    %69 = vmatprep.subr.mxu0 0.0
    %70 = vmatpush1.msra.mxu0 0.0
    %71 = vmatprep.subr.mxu0 0.0
    %72 = vmatpush1.msra.mxu0 0.0
    %73 = vmatprep.subr.mxu0 0.0
    %74 = vmatpush1.msra.mxu0 0.0
    %75 = vmatprep.subr.mxu0 0.0
    %76 = vmatpush1.msra.mxu0 0.0
    %77 = vmatprep.subr.mxu0 0.0
    %78 = vmatpush1.msra.mxu0 0.0
    %79 = vmatprep.subr.mxu0 0.0
    %80 = vmatpush1.msra.mxu0 0.0
    %81 = vmatprep.subr.mxu0 0.0
    %82 = vmatpush1.msra.mxu0 0.0
    %83 = vmatprep.subr.mxu0 0.0
    %84 = vmatpush1.msra.mxu0 0.0
    %85 = vmatprep.subr.mxu0 0.0
    %86 = vmatpush1.msra.mxu0 0.0
    %87 = vmatprep.subr.mxu0 0.0
    %88 = vmatpush1.msra.mxu0 0.0
    %89 = vmatprep.subr.mxu0 0.0
    %90 = vmatpush1.msra.mxu0 0.0
    %91 = vmatprep.subr.mxu0 0.0
    %92 = vmatpush1.msra.mxu0 0.0
    %93 = vmatprep.subr.mxu0 0.0
    %94 = vmatpush1.msra.mxu0 0.0
    %95 = vmatprep.subr.mxu0 0.0
    %96 = vmatpush1.msra.mxu0 0.0
    %97 = vmatprep.subr.mxu0 0.0
    %98 = vmatpush1.msra.mxu0 0.0
    %99 = vmatprep.subr.mxu0 0.0
    %100 = vmatpush1.msra.mxu0 0.0
    %101 = vmatprep.subr.mxu0 0.0
    %102 = vmatpush1.msra.mxu0 0.0
    %103 = vmatprep.subr.mxu0 0.0
    %104 = vmatpush1.msra.mxu0 0.0
    %105 = vmatprep.subr.mxu0 0.0
    %106 = vmatpush1.msra.mxu0 0.0
    %107 = vmatprep.subr.mxu0 0.0
    %108 = vmatpush1.msra.mxu0 0.0
    %109 = vmatprep.subr.mxu0 0.0
    %110 = vmatpush1.msra.mxu0 0.0
    %111 = vmatprep.subr.mxu0 0.0
    %112 = vmatpush1.msra.mxu0 0.0
    %113 = vmatprep.subr.mxu0 0.0
    %114 = vmatpush1.msra.mxu0 0.0
    %115 = vmatprep.subr.mxu0 0.0
    %116 = vmatpush1.msra.mxu0 0.0
    %117 = vmatprep.subr.mxu0 0.0
    %118 = vmatpush1.msra.mxu0 0.0
    %119 = vmatprep.mubr.f32.mxu0 0.0
    %120 = vmatmul.mubr.f32.gmra.mrb[0].mxu0 %v53
    %v121 = vpop.f32.mrb[0].mxu0
    %v122 = vadd.f32 %v49, %v121
    %v123 = vpop.f32.mrb[0].mxu0
    %124 = vdwg.mxu0
    %v125 = vand.u32 2147483647, %v122
    %vm126 = vcmp.le.f32.partialorder %v125, 0.7853982
    %vm127 = vcmp.lt.s32.totalorder %v122, 0
    %v128 = vand.u32 %v122, 2139095040
    %v129 = vshrl.u32 %v128, 23
    %v130 = vsub.s32 %v129, 127
    %v131 = vand.u32 2147483647, %v122
    %v132 = vand.u32 %v131, 8388607
    %v133 = vor.u32 %v132, 8388608
    %v134 = vsub.s32 0, %v133
    %v135 = vadd.s32 %v130, 1
    %vm136 = vcmp.gt.s32.totalorder %v135, 0
    %v137 = vsel %vm136, %v135, 0
    %v138 = vshrl.u32 %v137, 5
    %v139 = vand.u32 %v137, 31
    %v140 = vsub.s32 32, %v139
    %v141 = vshrl.u32 683565275, %v140
    %v142 = vshll.u32 683565275, %v139
    %v143 = vshrl.u32 2475754826, %v140
    %v144 = vor.u32 %v142, %v143
    %v145 = vshll.u32 2475754826, %v139
    %v146 = vshrl.u32 2131351028, %v140
    %v147 = vor.u32 %v145, %v146
    %v148 = vshll.u32 2131351028, %v139
    %v149 = vshrl.u32 2102212464, %v140
    %v150 = vor.u32 %v148, %v149
    %v151 = vshll.u32 2102212464, %v139
    %v152 = vshrl.u32 920167782, %v140
    %v153 = vor.u32 %v151, %v152
    %v154 = vshll.u32 920167782, %v139
    %v155 = vshrl.u32 1326507024, %v140
    %v156 = vor.u32 %v154, %v155
    %vm157 = vcmp.lt.s32.totalorder %v138, 1
    %vm158 = vcmp.lt.s32.totalorder %v138, 2
    %vm159 = vcmp.lt.s32.totalorder %v138, 3
    %vm160 = vcmp.lt.s32.totalorder %v138, 4
    %v161 = vsel %vm157, %v141, %v144
    %v162 = vsel %vm160, %v150, 2102212464
    %v163 = vsel %vm159, %v147, %v162
    %v164 = vsel %vm158, %v161, %v163
    %v165 = vsel %vm157, %v144, %v147
    %v166 = vsel %vm160, %v153, 920167782
    %v167 = vsel %vm159, %v150, %v166
    %v168 = vsel %vm158, %v165, %v167
    %v169 = vsel %vm157, %v147, %v150
    %v170 = vsel %vm160, %v156, 1326507024
    %v171 = vsel %vm159, %v153, %v170
    %v172 = vsel %vm158, %v169, %v171
    %v173 = vshll.u32 %v133, 8
    %v174 = vmul.u32.u64.compose %v173, %v172
    %v175 = vextract.low.u32 %v174
    %v176 = vextract.high.u32 %v174
    %v177 = vmul.u32.u64.compose %v173, %v168
    %v178 = vextract.low.u32 %v177
    %v179 = vextract.high.u32 %v177
    %v180 = vmul.u32 %v173, %v164
    %v181 = vadd.s32 %v176, %v178
    %vm182 = vc.u32 %v176, %v178
    %v183 = vadd.s32 %v179, 1
    %v184 = vsel %vm182, %v183, %v179
    %v185 = vadd.s32 %v180, %v184
    %v186 = vadd.s32 %v185, 536870912
    %v187 = vshrl.u32 %v186, 30
    %v188 = vshll.u32 %v187, 30
    %v189 = vsub.s32 %v185, %v188
    %vm190 = vcmp.lt.s32.totalorder %v189, 0
    %v191 = vsub.s32 0, %v189
    %v192 = vsel %vm190, %v191, %v189
    %v193 = vclz %v192
    %v194 = vsub.s32 %v193, 2
    %vm195 = vcmp.gt.s32.totalorder 0, %v194
    %v196 = vsel %vm195, 0, %v194
    %v197 = vsub.s32 32, %v196
    %v198 = vshll.u32 %v189, %v196
    %v199 = vshrl.u32 %v181, %v197
    %v200 = vor.u32 %v198, %v199
    %v201 = vsub.s32 4294967266, %v196
    %v202 = vadd.s32 %v201, 127
    %v203 = vshll.u32 %v202, 23
    %v204 = vor.u32 4788187, %v203
    %v205 = vand.u32 2147483647, %v204
    %v207 = vcvt.s32.f32 %v200
    %v208 = vmul.f32 %v207, %v205
    %v209 = vxor.u32 %v208, 2147483648
    %v210 = vsel %vm127, %v209, %v208
    %v211 = vsub.s32 4, %v187
    %v212 = vsel %vm127, %v211, %v187
    %v213 = vsel %vm126, %v122, %v210
    %v214 = vsel %vm126, 0, %v212
    %v215 = vcosq.f32.pop %v213
    %v216 = vsinq.f32.pop %v213
    %vm217 = vweird.f32 %v122
    %v218 = vadd.s32 %v214, 3
    %v219 = vand.u32 %v218, 3
    %vm220 = vcmp.lt.s32.totalorder %v219, 2
    %vm221 = vcmp.eq.s32.totalorder %v219, 0
    %v222 = vxor.u32 %v216, 2147483648
    %v223 = vsel %vm221, %v215, %v222
    %vm224 = vcmp.eq.s32.totalorder %v219, 2
    %v225 = vxor.u32 %v215, 2147483648
    %v226 = vsel %vm224, %v225, %v216
    %v227 = vsel %vm220, %v223, %v226
    %v228 = vsel %vm217, nan, %v227
    %229 = vst [vmem:[#allocation7] sm:$0xf] %v228
    // Predicated region
    $region22: #{tpu_custom_call.1} parent=1 // pred_check
      _
    $region23: #{tpu_custom_call.1} parent=1 // pred_check_branch
      %231 = sbr.rel (0) target = $region25
    $region24: #{tpu_custom_call.1} parent=1 // pred_region
      %s233 = ssub.s32 64, 64
      %234 = vsyncadd [#allocation4], %s233
      %s236 = sshll.u32 [#allocation7], 4
      %s237 = int_to_ptr.vmem [resolvable:$true] %s236
      %239 = dma.vmem_to_hbm [thread:$0]  %s237, 64, %s3, [#allocation4]
    $region25: #{tpu_custom_call.1} parent=1 // pred_fallthru
      _
    // Predicated region
    $region26: #{tpu_custom_call.1} parent=1 // pred_check
      _
    $region27: #{tpu_custom_call.1} parent=1 // pred_check_branch
      %241 = sbr.rel (0) target = $region29
    $region28: #{tpu_custom_call.1} parent=1 // pred_region
      %242 = dma.done [#allocation4], 64
    $region29: #{tpu_custom_call.1} parent=1 // pred_fallthru
      _
    %243 = vsyncpa [#allocation3], 1
    %244 = vsyncpa [#allocation6], 1
    %245 = vsyncpa [#allocation4], 1

</llo_original>
